<compile_context>
chip_gen: v5e
topology: v5e:2x2
jax: 0.10.0
libtpu: 0.0.40
codegen_flags: <defaults>
</compile_context>

<pallas_src>
import functools

import jax
import jax.numpy as jnp
import numpy as np
from jax.experimental import pallas as pl
from jax.experimental.pallas import tpu as pltpu


def conv_block_kernel(xp_ref, w0_ref, b0_ref, alpha_ref, w1_ref, o_ref, *, TH, W):
    # xp_ref:    (Hp, Wp, Cin)  zero-padded bf16 NHWC image of current batch b
    #                           (VMEM-resident across this batch's row tiles)
    # w0_ref:    (Cout, 9*Cin)  bf16 3x3 weights, w0_t[c, (ky*3+kx)*Cin + ci]
    # b0_ref:    (Cout, 1)      f32 conv0 bias (column -> lane broadcast)
    # alpha_ref: (1, 1)         f32 PReLU slope (SMEM scalar)
    # w1_ref:    (Cout, Cout)   f32 1x1 conv weights, (out, in)
    # o_ref:     (Cout, TH*W)   lane-dense f32 output tile (TH*W % 128 == 0)
    Cin = xp_ref.shape[-1]

    # Padded input rows needed by this tile of TH output rows: [h0, h0+TH+2).
    h0 = pl.multiple_of(pl.program_id(1) * TH, TH)
    rows = xp_ref[pl.ds(h0, TH + 2), :, :]               # (TH+2, Wp, Cin) bf16

    # im2col IN REGISTERS: 9 shifted (TH, W, Cin) windows concatenated along
    # the channel (lane) axis -> (TH, W, 9*Cin).  No VMEM scratch round trip,
    # no masked band stores.  W % 8 == 0 makes the reshape a free collapse.
    taps = [rows[ky:ky + TH, kx:kx + W, :]
            for ky in range(3) for kx in range(3)]
    patch = jnp.concatenate(taps, axis=-1).reshape(TH * W, 9 * Cin)

    # conv0: ONE fused MXU matmul, K = 9*Cin, bf16 inputs, f32 accumulation.
    # Contracting dim 1 of both operands (w0 @ patch^T) yields the result
    # channel-major (Cout, TH*W) so everything downstream is lane-dense.
    acc = jax.lax.dot_general(
        w0_ref[...], patch,
        dimension_numbers=(((1,), (1,)), ((), ())),
        preferred_element_type=jnp.float32)
    acc = acc + b0_ref[...]                               # (Cout, 1) broadcast

    # PReLU.  nn.PReLU() default is a single shared slope (num_parameters=1);
    # a per-channel variant would simply be a (Cout, 1) VMEM column like b0.
    alpha = alpha_ref[0, 0]
    y = jnp.where(acc > 0, acc, alpha * acc)              # f32 VPU epilogue

    # conv1: 1x1 conv, no bias == (Cout, Cout) @ (Cout, TH*W) channel matmul.
    z = jnp.dot(w1_ref[...], y, preferred_element_type=jnp.float32)

    o_ref[...] = z.astype(o_ref.dtype)                    # full-lane store


# v7x-safe working-set target (64 MiB physical VMEM there; on v5e/v6e with
# 128 MiB physical both this budget and vmem_limit_bytes can be raised ~2x).
_VMEM_TILE_BUDGET = 40 * 1024 * 1024
_SLAB_BYTES_CAP = 512 * 1024   # keep the in-register im2col slab bounded


def _pick_row_tile(H, W, Cin, Cout, Hp, Wp):
    """LARGEST divisor TH of H whose per-step working set fits the VMEM budget.

    Fewer / fatter steps amortize the ~0.35 us per-grid-step overhead; with
    Cin=4 / Cout=8 the kernel is step-overhead + HBM bound, not MXU bound.
    """
    image_bytes = 2 * (Hp * Wp * Cin * 2)        # double-buffered bf16 image block
    best = 1
    for th in range(1, H + 1):
        if H % th:
            continue
        out_bytes = 2 * (Cout * th * W * 4)      # double-buffered f32 output tile
        slab_bytes = th * W * 9 * Cin * 2        # bf16 im2col slab (vregs / spill)
        work_bytes = 3 * (Cout * th * W * 4)     # f32 acc / PReLU / conv1 temps
        if (slab_bytes <= _SLAB_BYTES_CAP and
                image_bytes + out_bytes + slab_bytes + work_bytes
                <= _VMEM_TILE_BUDGET):
            best = th
    return best


@jax.jit
def conv_block_forward(x_nchw, w0_oihw, b0, alpha, w1_oihw):
    """Pallas implementation of ConvBlock.forward with norm=None."""
    B, Cin, H, W = x_nchw.shape
    Cout = w0_oihw.shape[0]
    Hp, Wp = H + 2, W + 2
    if W % 8 != 0:
        raise ValueError("W must be a multiple of 8 (pad in the caller) so the "
                         "(TH, W, 9*Cin) -> (TH*W, 9*Cin) collapse is free.")
    TH = _pick_row_tile(H, W, Cin, Cout, Hp, Wp)
    n_h = H // TH

    # Prep (fused XLA ops under jit): NCHW -> NHWC, zero pad, cast image to
    # bf16 (halves HBM DMA + VMEM of the dominant traffic; matmul accumulation
    # and the elementwise epilogue remain f32).
    x_nhwc = jnp.transpose(x_nchw, (0, 2, 3, 1))
    xp = jnp.pad(x_nhwc, ((0, 0), (1, 1), (1, 1), (0, 0))).astype(jnp.bfloat16)

    # Weight repack: OIHW -> (Cout, 9*Cin), column order (ky*3+kx)*Cin + ci.
    w0_t = jnp.transpose(w0_oihw, (0, 2, 3, 1)).reshape(Cout, 9 * Cin)
    w0_t = w0_t.astype(jnp.bfloat16)
    b0_col = b0.reshape(Cout, 1).astype(jnp.float32)
    alpha_2d = jnp.asarray(alpha, jnp.float32).reshape(1, 1)
    w1_m = w1_oihw[:, :, 0, 0].astype(jnp.float32)        # (Cout_out, Cout_in)

    kernel = functools.partial(conv_block_kernel, TH=TH, W=W)

    out = pl.pallas_call(
        kernel,
        out_shape=jax.ShapeDtypeStruct((B, n_h, Cout, TH * W), jnp.float32),
        grid=(B, n_h),
        in_specs=[
            # Padded image: resident per batch element (index_map ignores h).
            pl.BlockSpec((None, Hp, Wp, Cin), lambda b, h: (b, 0, 0, 0)),
            # Small weights / bias: untiled VMEM residents (constant block 0).
            pl.BlockSpec((Cout, 9 * Cin), lambda b, h: (0, 0)),
            pl.BlockSpec((Cout, 1), lambda b, h: (0, 0)),
            pl.BlockSpec(memory_space=pltpu.MemorySpace.SMEM),   # PReLU alpha
            pl.BlockSpec((Cout, Cout), lambda b, h: (0, 0)),
        ],
        out_specs=pl.BlockSpec((None, None, Cout, TH * W),
                               lambda b, h: (b, h, 0, 0)),
        compiler_params=pltpu.CompilerParams(
            # No cross-step accumulation: every (b, h) writes a distinct output
            # block, so both axes can shard across v7x's two TensorCores.
            dimension_semantics=("parallel", "parallel"),
            # v7x-safe (64 MiB physical); raise toward ~96-112 MiB on v5e/v6e
            # together with _VMEM_TILE_BUDGET for bigger row tiles.
            vmem_limit_bytes=48 * 1024 * 1024,
        ),
    )(xp, w0_t, b0_col, alpha_2d, w1_m)

    # (B, n_h, Cout, TH*W) -> (B, Cout, H, W): layout untangle in XLA.
    # TODO(synk): for W % 128 == 0 write the kernel output directly in NCHW
    # (out block (None, Cout, TH, W)) and drop this extra pass over the output.
    out = out.reshape(B, n_h, Cout, TH, W)
    out = jnp.transpose(out, (0, 2, 1, 3, 4)).reshape(B, Cout, H, W)
    return out


def reference_forward(x_nchw, w0_oihw, b0, alpha, w1_oihw):
    """Plain-JAX f32 reference mirroring the PyTorch module (norm=None)."""
    y = jax.lax.conv_general_dilated(
        x_nchw, w0_oihw, window_strides=(1, 1), padding=((1, 1), (1, 1)),
        dimension_numbers=("NCHW", "OIHW", "NCHW"))
    y = y + b0[None, :, None, None]
    y = jnp.where(y > 0, y, alpha * y)
    z = jax.lax.conv_general_dilated(
        y, w1_oihw, window_strides=(1, 1), padding=((0, 0), (0, 0)),
        dimension_numbers=("NCHW", "OIHW", "NCHW"))
    return z


if __name__ == "__main__":
    # Small shapes consistent with ConvBlock(input_size=4, output_size=8).
    B, Cin, Cout, H, W = 2, 4, 8, 16, 16

    key = jax.random.PRNGKey(0)
    kx_, kw0, kb0, kw1 = jax.random.split(key, 4)

    x = jax.random.normal(kx_, (B, Cin, H, W), dtype=jnp.float32)
    w0 = jax.random.normal(kw0, (Cout, Cin, 3, 3), dtype=jnp.float32) * 0.1
    b0 = jax.random.normal(kb0, (Cout,), dtype=jnp.float32) * 0.1
    w1 = jax.random.normal(kw1, (Cout, Cout, 1, 1), dtype=jnp.float32) * 0.1
    alpha = jnp.float32(0.25)  # PyTorch nn.PReLU() default init, shared slope
    # TODO(synk): norm='instance'/'batch' branches not implemented (module default is norm=None).

    out = conv_block_forward(x, w0, b0, alpha, w1)
    out = jax.block_until_ready(out)

    ref = reference_forward(x, w0, b0, alpha, w1)
    # Image / 3x3 weights run through the MXU in bf16 (f32 accumulation), so
    # tolerances are loosened relative to the pure-f32 PyTorch numerics.
    np.testing.assert_allclose(np.asarray(out), np.asarray(ref),
                               rtol=2e-2, atol=2e-2)
    print("KERNEL_OK")
</pallas_src>

<mosaic_0001>
module attributes {stable_mosaic.version = 11 : i64} {
  func.func @conv_block_kernel(%arg0: i32, %arg1: i32, %arg2: memref<1x18x18x4xbf16, #tpu.memory_space<vmem>>, %arg3: memref<8x36xbf16, #tpu.memory_space<vmem>>, %arg4: memref<8x1xf32, #tpu.memory_space<vmem>>, %arg5: memref<1x1xf32, #tpu.memory_space<smem>>, %arg6: memref<8x8xf32, #tpu.memory_space<vmem>>, %arg7: memref<1x1x8x256xf32, #tpu.memory_space<vmem>>) attributes {dimension_semantics = [#tpu.dimension_semantics<parallel>, #tpu.dimension_semantics<parallel>], iteration_bounds = array<i64: 2, 1>, scalar_prefetch = 0 : i64, scratch_operands = 0 : i64, tpu.core_type = #tpu.core_type<tc>, window_params = [{transform_indices = @transform_0, window_bounds = array<i64: 1, 18, 18, 4>}, {pipeline_mode = #tpu.pipeline_mode<synchronous>, transform_indices = @transform_1, window_bounds = array<i64: 8, 36>}, {pipeline_mode = #tpu.pipeline_mode<synchronous>, transform_indices = @transform_2, window_bounds = array<i64: 8, 1>}, {transform_indices = @transform_3, window_bounds = array<i64: 1, 1>}, {pipeline_mode = #tpu.pipeline_mode<synchronous>, transform_indices = @transform_4, window_bounds = array<i64: 8, 8>}, {transform_indices = @transform_5, window_bounds = array<i64: 1, 1, 8, 256>}]} {
    %c16_i32 = arith.constant 16 : i32
    %0 = arith.muli %arg1, %c16_i32 : i32
    %1 = tpu.assume_multiple %0, 16 : i32
    %c0 = arith.constant 0 : index
    %2 = arith.index_cast %1 : i32 to index
    %c0_0 = arith.constant 0 : index
    %c0_1 = arith.constant 0 : index
    %3 = vector.load %arg2[%c0, %2, %c0_0, %c0_1] : memref<1x18x18x4xbf16, #tpu.memory_space<vmem>>, vector<1x18x18x4xbf16>
    %4 = vector.shape_cast %3 : vector<1x18x18x4xbf16> to vector<18x18x4xbf16>
    %5 = vector.extract_strided_slice %4 {offsets = [0, 0, 0], sizes = [16, 16, 4], strides = [1, 1, 1]} : vector<18x18x4xbf16> to vector<16x16x4xbf16>
    %6 = vector.extract_strided_slice %4 {offsets = [0, 1, 0], sizes = [16, 16, 4], strides = [1, 1, 1]} : vector<18x18x4xbf16> to vector<16x16x4xbf16>
    %7 = vector.extract_strided_slice %4 {offsets = [0, 2, 0], sizes = [16, 16, 4], strides = [1, 1, 1]} : vector<18x18x4xbf16> to vector<16x16x4xbf16>
    %8 = vector.extract_strided_slice %4 {offsets = [1, 0, 0], sizes = [16, 16, 4], strides = [1, 1, 1]} : vector<18x18x4xbf16> to vector<16x16x4xbf16>
    %9 = vector.extract_strided_slice %4 {offsets = [1, 1, 0], sizes = [16, 16, 4], strides = [1, 1, 1]} : vector<18x18x4xbf16> to vector<16x16x4xbf16>
    %10 = vector.extract_strided_slice %4 {offsets = [1, 2, 0], sizes = [16, 16, 4], strides = [1, 1, 1]} : vector<18x18x4xbf16> to vector<16x16x4xbf16>
    %11 = vector.extract_strided_slice %4 {offsets = [2, 0, 0], sizes = [16, 16, 4], strides = [1, 1, 1]} : vector<18x18x4xbf16> to vector<16x16x4xbf16>
    %12 = vector.extract_strided_slice %4 {offsets = [2, 1, 0], sizes = [16, 16, 4], strides = [1, 1, 1]} : vector<18x18x4xbf16> to vector<16x16x4xbf16>
    %13 = vector.extract_strided_slice %4 {offsets = [2, 2, 0], sizes = [16, 16, 4], strides = [1, 1, 1]} : vector<18x18x4xbf16> to vector<16x16x4xbf16>
    %14 = tpu.concatenate %5, %6, %7, %8, %9, %10, %11, %12, %13 in 2 : vector<16x16x4xbf16>, vector<16x16x4xbf16>, vector<16x16x4xbf16>, vector<16x16x4xbf16>, vector<16x16x4xbf16>, vector<16x16x4xbf16>, vector<16x16x4xbf16>, vector<16x16x4xbf16>, vector<16x16x4xbf16> -> vector<16x16x36xbf16>
    %15 = vector.shape_cast %14 : vector<16x16x36xbf16> to vector<256x36xbf16>
    %c0_2 = arith.constant 0 : index
    %c0_3 = arith.constant 0 : index
    %16 = vector.load %arg3[%c0_2, %c0_3] : memref<8x36xbf16, #tpu.memory_space<vmem>>, vector<8x36xbf16>
    %cst = arith.constant dense<0.000000e+00> : vector<8x256xf32>
    %17 = tpu.matmul %16, %15, %cst {dimension_numbers = #tpu.dot_dimension_numbers<[1], [1], [0], [0], [0, 0, 1, 0], [], []>} : vector<8x36xbf16>, vector<256x36xbf16>, vector<8x256xf32> -> vector<8x256xf32>
    %c0_4 = arith.constant 0 : index
    %c0_5 = arith.constant 0 : index
    %18 = vector.load %arg4[%c0_4, %c0_5] : memref<8x1xf32, #tpu.memory_space<vmem>>, vector<8x1xf32>
    %19 = vector.broadcast %18 : vector<8x1xf32> to vector<8x256xf32>
    %20 = arith.addf %17, %19 : vector<8x256xf32>
    %c0_6 = arith.constant 0 : index
    %c0_7 = arith.constant 0 : index
    %21 = memref.load %arg5[%c0_6, %c0_7] : memref<1x1xf32, #tpu.memory_space<smem>>
    %cst_8 = arith.constant 0.000000e+00 : f32
    %22 = vector.broadcast %cst_8 : f32 to vector<8x256xf32>
    %23 = arith.cmpf ogt, %20, %22 : vector<8x256xf32>
    %24 = vector.broadcast %21 : f32 to vector<8x256xf32>
    %25 = arith.mulf %24, %20 : vector<8x256xf32>
    %26 = arith.select %23, %20, %25 : vector<8x256xi1>, vector<8x256xf32>
    %c0_9 = arith.constant 0 : index
    %c0_10 = arith.constant 0 : index
    %27 = vector.load %arg6[%c0_9, %c0_10] : memref<8x8xf32, #tpu.memory_space<vmem>>, vector<8x8xf32>
    %cst_11 = arith.constant dense<0.000000e+00> : vector<8x256xf32>
    %28 = tpu.matmul %27, %26, %cst_11 {dimension_numbers = #tpu.dot_dimension_numbers<[1], [0], [0], [1], [0, 0, 1, 1], [], []>} : vector<8x8xf32>, vector<8x256xf32>, vector<8x256xf32> -> vector<8x256xf32>
    %c0_12 = arith.constant 0 : index
    %c0_13 = arith.constant 0 : index
    %c0_14 = arith.constant 0 : index
    %c0_15 = arith.constant 0 : index
    %29 = vector.load %arg7[%c0_12, %c0_13, %c0_14, %c0_15] : memref<1x1x8x256xf32, #tpu.memory_space<vmem>>, vector<1x1x8x256xf32>
    %30 = vector.shape_cast %29 : vector<1x1x8x256xf32> to vector<8x256xf32>
    %31 = vector.shape_cast %28 : vector<8x256xf32> to vector<1x1x8x256xf32>
    tpu.vector_store %arg7[%c0_12, %c0_13, %c0_14, %c0_15], %31 {strides = array<i32>} : memref<1x1x8x256xf32, #tpu.memory_space<vmem>>, vector<1x1x8x256xf32>,
    return
  }
  func.func @transform_0(%arg0: i32, %arg1: i32) -> (i32, i32, i32, i32) {
    %c0_i32 = arith.constant 0 : i32
    %c0_i32_0 = arith.constant 0 : i32
    %c0_i32_1 = arith.constant 0 : i32
    %c0_i32_2 = arith.constant 0 : i32
    return %arg0, %c0_i32, %c0_i32_0, %c0_i32_1 : i32, i32, i32, i32
  }
  func.func @transform_1(%arg0: i32, %arg1: i32) -> (i32, i32) {
    %c0_i32 = arith.constant 0 : i32
    %c0_i32_0 = arith.constant 0 : i32
    %c0_i32_1 = arith.constant 0 : i32
    return %c0_i32, %c0_i32_0 : i32, i32
  }
  func.func @transform_2(%arg0: i32, %arg1: i32) -> (i32, i32) {
    %c0_i32 = arith.constant 0 : i32
    %c0_i32_0 = arith.constant 0 : i32
    %c0_i32_1 = arith.constant 0 : i32
    return %c0_i32, %c0_i32_0 : i32, i32
  }
  func.func @transform_3(%arg0: i32, %arg1: i32) -> (i32, i32) {
    %c0_i32 = arith.constant 0 : i32
    %c0_i32_0 = arith.constant 0 : i32
    %c0_i32_1 = arith.constant 0 : i32
    return %c0_i32, %c0_i32_0 : i32, i32
  }
  func.func @transform_4(%arg0: i32, %arg1: i32) -> (i32, i32) {
    %c0_i32 = arith.constant 0 : i32
    %c0_i32_0 = arith.constant 0 : i32
    %c0_i32_1 = arith.constant 0 : i32
    return %c0_i32, %c0_i32_0 : i32, i32
  }
  func.func @transform_5(%arg0: i32, %arg1: i32) -> (i32, i32, i32, i32) {
    %c0_i32 = arith.constant 0 : i32
    %c0_i32_0 = arith.constant 0 : i32
    %c0_i32_1 = arith.constant 0 : i32
    return %arg0, %arg1, %c0_i32, %c0_i32_0 : i32, i32, i32, i32
  }
}

</mosaic_0001>

<llo_original>
// kernel: conv_block_forward.1
$region0: #{conv_block_forward.1}
  #allocation0 [shape = 'u32[]', space=smem, size = 0x4, offset = 0x4, fixed_abs, tag = 'smem constant byte address 0x4 - core index']
  #allocation1 [shape = 'u32[72,128]{1,0:T(1,128)}', space=vmem, size = 0x9000, scoped, tag = 'internal scratch']
  #allocation2 [shape = 'f32[1,1]{1,0:T(1,128)S(6)}', space=smem, size = 0x200, scoped, tag = 'scoped memory for conv_block_forward.1']
  %s0 = inlined_call_operand.vmem [shape: bf16[2,18,18,4], index: 0, kind: input, shape index: {}]
  %s1 = inlined_call_operand.vmem [shape: bf16[8,36], index: 1, kind: input, shape index: {}]
  %s2 = inlined_call_operand.vmem [shape: f32[8,1], index: 2, kind: input, shape index: {}]
  %s3 = inlined_call_operand.<no memory space> [shape: f32[1,1], index: 3, kind: input, shape index: {}]
  %s4 = inlined_call_operand.vmem [shape: f32[8,8], index: 4, kind: input, shape index: {}]
  %s5 = inlined_call_operand.vmem [shape: f32[2,1,8,256], index: 5, kind: output, shape index: {}]
  %s6 = sld [smem:[#allocation0]]
  $region53: #{conv_block_forward.1} parent=0
    _
  %s8 = ssub.s32 1, %s6
  %s9 = scalar_select 0, %s8, %s6
  %10 = sst [smem:[#allocation2]] %s3
  loop: start=0, step=1, limit=4
  $region2: #{conv_block_forward.1} parent=0 // loop_pre_header
    _
  $region3: #{conv_block_forward.1} parent=0 // loop_header
    %s12 = sphi 0, %s16
    %p13 = scmp.ge.s32.totalorder %s12, 4
    %s19 = sphi 0, %s31
    %s20 = sphi 0, %s27
    %s21 = sphi 0, %s19
    %s22 = sphi 0, %s20
    %s23 = sphi 0, %s21
    %s24 = sphi 0, %s22
    %s34 = sphi 0, %s36
    %s37 = sphi 0, %s34
    %s38 = sphi 0, %s37
    %s54 = sphi 0, %s38
    %s58 = sphi 0, %s58
    %s60 = sphi 0, %s58
    %s61 = sphi 0, %s60
    %s75 = sphi 0, %s61
    %s79 = sphi 0, %s79
    %s81 = sphi 0, %s79
    %s82 = sphi 0, %s81
    %s96 = sphi 0, %s82
    %s100 = sphi 0, %s100
    %s102 = sphi 0, %s100
    %s103 = sphi 0, %s102
    %s117 = sphi 0, %s103
    %s121 = sphi 0, %s121
    %s123 = sphi 0, %s121
    %s124 = sphi 0, %s123
    %s138 = sphi 0, %s124
    %s146 = sphi 0, %s148
    %s149 = sphi 0, %s146
    %s150 = sphi 0, %s149
    %s166 = sphi 0, %s150
  $region4: #{conv_block_forward.1} parent=0 // loop_header_branch
    %15 = sbr.rel (%p13) target = $region8
  $region5: #{conv_block_forward.1} parent=0 // loop_body
    %s17 = ssub.s32 %s12, 1
    %s18 = ssub.s32 %s12, 2
    %s25 = sadd.s32 1, %s20
    %p26 = scmp.ge.s32.totalorder %s25, 1
    %s27 = scalar_select %p26, 0, %s25
    %s28 = sadd.s32 1, %s19
    %s29 = scalar_select %p26, %s28, %s19
    %p30 = scmp.ge.s32.totalorder %s29, 2
    %s31 = scalar_select %p30, 0, %s29
    %s32 = ssub.s32 %s19, %s31
    %p33 = scmp.eq.s32.totalorder %s32, 0
    %s35 = sadd.s32 %s34, 1
    %s36 = scalar_select %p33, %s34, %s35
    %p39 = pneg %p33
    %p40 = scmp.eq.s32.totalorder %s12, 1
    %p41 = por %p39, %p40
    %p42 = scmp.ne.s32.totalorder %s34, %s37
    %p43 = scmp.eq.s32.totalorder %s12, 0
    %p44 = por %p42, %p43
    %p45 = scmp.ne.s32.totalorder %s34, %s37
    %p46 = scmp.eq.s32.totalorder %s17, 1
    %p47 = por %p45, %p46
    %p48 = scmp.ne.s32.totalorder %s37, %s38
    %p49 = scmp.eq.s32.totalorder %s17, 0
    %p50 = por %p48, %p49
    %p51 = scmp.ne.s32.totalorder %s37, %s38
    %p52 = scmp.eq.s32.totalorder %s18, 1
    %p53 = por %p51, %p52
    %p55 = scmp.ne.s32.totalorder %s38, %s54
    %p56 = scmp.eq.s32.totalorder %s18, 0
    %p57 = por %p55, %p56
    %s59 = sadd.s32 %s58, 1
    %p62 = scmp.eq.s32.totalorder %s12, 1
    %p63 = scmp.ne.s32.totalorder %s58, %s60
    %p64 = scmp.eq.s32.totalorder %s12, 0
    %p65 = por %p63, %p64
    %p66 = scmp.ne.s32.totalorder %s58, %s60
    %p67 = scmp.eq.s32.totalorder %s17, 1
    %p68 = por %p66, %p67
    %p69 = scmp.ne.s32.totalorder %s60, %s61
    %p70 = scmp.eq.s32.totalorder %s17, 0
    %p71 = por %p69, %p70
    %p72 = scmp.ne.s32.totalorder %s60, %s61
    %p73 = scmp.eq.s32.totalorder %s18, 1
    %p74 = por %p72, %p73
    %p76 = scmp.ne.s32.totalorder %s61, %s75
    %p77 = scmp.eq.s32.totalorder %s18, 0
    %p78 = por %p76, %p77
    %s80 = sadd.s32 %s79, 1
    %p83 = scmp.eq.s32.totalorder %s12, 1
    %p84 = scmp.ne.s32.totalorder %s79, %s81
    %p85 = scmp.eq.s32.totalorder %s12, 0
    %p86 = por %p84, %p85
    %p87 = scmp.ne.s32.totalorder %s79, %s81
    %p88 = scmp.eq.s32.totalorder %s17, 1
    %p89 = por %p87, %p88
    %p90 = scmp.ne.s32.totalorder %s81, %s82
    %p91 = scmp.eq.s32.totalorder %s17, 0
    %p92 = por %p90, %p91
    %p93 = scmp.ne.s32.totalorder %s81, %s82
    %p94 = scmp.eq.s32.totalorder %s18, 1
    %p95 = por %p93, %p94
    %p97 = scmp.ne.s32.totalorder %s82, %s96
    %p98 = scmp.eq.s32.totalorder %s18, 0
    %p99 = por %p97, %p98
    %s101 = sadd.s32 %s100, 1
    %p104 = scmp.eq.s32.totalorder %s12, 1
    %p105 = scmp.ne.s32.totalorder %s100, %s102
    %p106 = scmp.eq.s32.totalorder %s12, 0
    %p107 = por %p105, %p106
    %p108 = scmp.ne.s32.totalorder %s100, %s102
    %p109 = scmp.eq.s32.totalorder %s17, 1
    %p110 = por %p108, %p109
    %p111 = scmp.ne.s32.totalorder %s102, %s103
    %p112 = scmp.eq.s32.totalorder %s17, 0
    %p113 = por %p111, %p112
    %p114 = scmp.ne.s32.totalorder %s102, %s103
    %p115 = scmp.eq.s32.totalorder %s18, 1
    %p116 = por %p114, %p115
    %p118 = scmp.ne.s32.totalorder %s103, %s117
    %p119 = scmp.eq.s32.totalorder %s18, 0
    %p120 = por %p118, %p119
    %s122 = sadd.s32 %s121, 1
    %p125 = scmp.eq.s32.totalorder %s12, 1
    %p126 = scmp.ne.s32.totalorder %s121, %s123
    %p127 = scmp.eq.s32.totalorder %s12, 0
    %p128 = por %p126, %p127
    %p129 = scmp.ne.s32.totalorder %s121, %s123
    %p130 = scmp.eq.s32.totalorder %s17, 1
    %p131 = por %p129, %p130
    %p132 = scmp.ne.s32.totalorder %s123, %s124
    %p133 = scmp.eq.s32.totalorder %s17, 0
    %p134 = por %p132, %p133
    %p135 = scmp.ne.s32.totalorder %s123, %s124
    %p136 = scmp.eq.s32.totalorder %s18, 1
    %p137 = por %p135, %p136
    %p139 = scmp.ne.s32.totalorder %s124, %s138
    %p140 = scmp.eq.s32.totalorder %s18, 0
    %p141 = por %p139, %p140
    %s142 = ssub.s32 %s19, %s31
    %s143 = ssub.s32 %s20, %s27
    %s144 = sor.u32 %s142, %s143
    %p145 = scmp.eq.s32.totalorder %s144, 0
    %s147 = sadd.s32 %s146, 1
    %s148 = scalar_select %p145, %s146, %s147
    %p151 = pneg %p145
    %p152 = scmp.eq.s32.totalorder %s12, 1
    %p153 = por %p151, %p152
    %p154 = scmp.ne.s32.totalorder %s146, %s149
    %p155 = scmp.eq.s32.totalorder %s12, 0
    %p156 = por %p154, %p155
    %p157 = scmp.ne.s32.totalorder %s146, %s149
    %p158 = scmp.eq.s32.totalorder %s17, 1
    %p159 = por %p157, %p158
    %p160 = scmp.ne.s32.totalorder %s149, %s150
    %p161 = scmp.eq.s32.totalorder %s17, 0
    %p162 = por %p160, %p161
    %p163 = scmp.ne.s32.totalorder %s149, %s150
    %p164 = scmp.eq.s32.totalorder %s18, 1
    %p165 = por %p163, %p164
    %p167 = scmp.ne.s32.totalorder %s150, %s166
    %p168 = scmp.eq.s32.totalorder %s18, 0
    %p169 = por %p167, %p168
    %p170 = scmp.le.s32.totalorder 1, %s12
    %p171 = scmp.lt.s32.totalorder %s12, 3
    %p172 = pnand %p170, %p171
    %p173 = pneg %p172
    // Predicated region
    $region9: #{conv_block_forward.1} parent=5 // pred_check
      _
    $region10: #{conv_block_forward.1} parent=5 // pred_check_branch
      %175 = sbr.rel (%p172) target = $region12
    $region11: #{conv_block_forward.1} parent=5 // pred_region
      %s176 = ssub.s32 %s12, 1
      // Predicated region
      $region13: #{conv_block_forward.1} parent=11 // pred_check
        %p177 = pneg %p71
      $region14: #{conv_block_forward.1} parent=11 // pred_check_branch
        %179 = sbr.rel (%p177) target = $region16
      $region15: #{conv_block_forward.1} parent=11 // pred_region
        _
      $region16: #{conv_block_forward.1} parent=11 // pred_fallthru
        _
      // Predicated region
      $region17: #{conv_block_forward.1} parent=11 // pred_check
        %p180 = pneg %p92
      $region18: #{conv_block_forward.1} parent=11 // pred_check_branch
        %182 = sbr.rel (%p180) target = $region20
      $region19: #{conv_block_forward.1} parent=11 // pred_region
        _
      $region20: #{conv_block_forward.1} parent=11 // pred_fallthru
        _
      // Predicated region
      $region21: #{conv_block_forward.1} parent=11 // pred_check
        %p183 = pneg %p113
      $region22: #{conv_block_forward.1} parent=11 // pred_check_branch
        %185 = sbr.rel (%p183) target = $region24
      $region23: #{conv_block_forward.1} parent=11 // pred_region
        _
      $region24: #{conv_block_forward.1} parent=11 // pred_fallthru
        _
      // Predicated region
      $region25: #{conv_block_forward.1} parent=11 // pred_check
        %p186 = pneg %p134
      $region26: #{conv_block_forward.1} parent=11 // pred_check_branch
        %188 = sbr.rel (%p186) target = $region28
      $region27: #{conv_block_forward.1} parent=11 // pred_region
        _
      $region28: #{conv_block_forward.1} parent=11 // pred_fallthru
        _
    $region12: #{conv_block_forward.1} parent=5 // pred_fallthru
      _
    %p189 = scmp.lt.s32.totalorder %s12, 2
    // Predicated region
    $region29: #{conv_block_forward.1} parent=5 // pred_check
      %p190 = pneg %p189
    $region30: #{conv_block_forward.1} parent=5 // pred_check_branch
      %192 = sbr.rel (%p190) target = $region32
    $region31: #{conv_block_forward.1} parent=5 // pred_region
      // Predicated region
      $region33: #{conv_block_forward.1} parent=31 // pred_check
        %p193 = pneg %p44
      $region34: #{conv_block_forward.1} parent=31 // pred_check_branch
        %195 = sbr.rel (%p193) target = $region36
      $region35: #{conv_block_forward.1} parent=31 // pred_region
        %p196 = scmp.lt.s32.totalorder %s19, 1
        %s197 = scalar_select %p196, %s19, 1
        %s198 = smul.addr %s197, 54
        %s199 = smul.addr %s198, 4
        %s200 = scalar_lea.vmem %s0, %s199
      $region36: #{conv_block_forward.1} parent=31 // pred_fallthru
        _
    $region32: #{conv_block_forward.1} parent=5 // pred_fallthru
      _
    %p201 = scmp.le.s32.totalorder 1, %s12
    %p202 = scmp.lt.s32.totalorder %s12, 3
    %p203 = pnand %p201, %p202
    %p204 = pneg %p203
    // Predicated region
    $region37: #{conv_block_forward.1} parent=5 // pred_check
      _
    $region38: #{conv_block_forward.1} parent=5 // pred_check_branch
      %206 = sbr.rel (%p203) target = $region40
    $region39: #{conv_block_forward.1} parent=5 // pred_region
      %s207 = ssub.s32 %s12, 1
      %p208 = scmp.lt.s32.totalorder %s21, 1
      %s209 = scalar_select %p208, %s21, 1
      %s210 = smul.addr %s209, 54
      %s211 = smul.addr %s210, 4
      %s212 = scalar_lea.vmem %s0, %s211
      %p213 = pneg %p50
      %p214 = pneg %p47
      %p215 = pneg %p71
      %p216 = pneg %p68
      %p217 = pneg %p92
      %p218 = pneg %p89
      %p219 = pneg %p113
      %p220 = pneg %p110
      %p221 = pneg %p134
      %p222 = pneg %p131
      %p223 = pneg %p162
      %p224 = pneg %p159
      %p225 = scmp.lt.s32.totalorder %s21, 1
      %s226 = scalar_select %p225, %s21, 1
      %p227 = scmp.lt.s32.totalorder %s22, 0
      %s228 = scalar_select %p227, %s22, 0
      %s229 = smul.addr %s228, 2
      %s230 = smul.addr %s226, 2
      %s231 = sadd.s32 %s229, %s230
      %s232 = smul.addr %s231, 8
      %s233 = scalar_lea.vmem %s5, %s232
      %p234 = scmp.lt.s32.totalorder %s21, 1
      %s235 = scalar_select %p234, %s21, 1
      %s236 = smul.addr %s235, 54
      %s237 = smul.addr %s236, 4
      %s238 = scalar_lea.vmem %s0, %s237
      %p239 = scmp.lt.s32.totalorder %s21, 1
      %s240 = scalar_select %p239, %s21, 1
      %p241 = scmp.lt.s32.totalorder %s22, 0
      %s242 = scalar_select %p241, %s22, 0
      %s243 = smul.addr %s242, 2
      %s244 = smul.addr %s240, 2
      %s245 = sadd.s32 %s243, %s244
      %s246 = smul.addr %s245, 8
      %s247 = scalar_lea.vmem %s5, %s246
      %s248 = smul.u32 %s22, 16
      %s249 = smul.u32 %s248, 3
      %s250 = smul.addr %s249, 4
      %s251 = scalar_lea.vmem %s238, %s250
      %v252 = vld [vmem:[%s251] sm:$0xf]
      %v253 = vld [vmem:[%s251 + $0x4] sm:$0xf]
      %v254 = vld [vmem:[%s251 + $0x8] sm:$0x1]
      %v255 = vld [vmem:[%s251 + $0xc] sm:$0xf]
      %v256 = vld [vmem:[%s251 + $0x10] sm:$0xf]
      %v257 = vld [vmem:[%s251 + $0x14] sm:$0x1]
      %v258 = vld [vmem:[%s251 + $0x18] sm:$0xf]
      %v259 = vld [vmem:[%s251 + $0x1c] sm:$0xf]
      %v260 = vld [vmem:[%s251 + $0x20] sm:$0x1]
      %v261 = vld [vmem:[%s251 + $0x24] sm:$0xf]
      %v262 = vld [vmem:[%s251 + $0x28] sm:$0xf]
      %v263 = vld [vmem:[%s251 + $0x2c] sm:$0x1]
      %v264 = vld [vmem:[%s251 + $0x30] sm:$0xf]
      %v265 = vld [vmem:[%s251 + $0x34] sm:$0xf]
      %v266 = vld [vmem:[%s251 + $0x38] sm:$0x1]
      %v267 = vld [vmem:[%s251 + $0x3c] sm:$0xf]
      %v268 = vld [vmem:[%s251 + $0x40] sm:$0xf]
      %v269 = vld [vmem:[%s251 + $0x44] sm:$0x1]
      %v270 = vld [vmem:[%s251 + $0x48] sm:$0xf]
      %v271 = vld [vmem:[%s251 + $0x4c] sm:$0xf]
      %v272 = vld [vmem:[%s251 + $0x50] sm:$0x1]
      %v273 = vld [vmem:[%s251 + $0x54] sm:$0xf]
      %v274 = vld [vmem:[%s251 + $0x58] sm:$0xf]
      %v275 = vld [vmem:[%s251 + $0x5c] sm:$0x1]
      %v276 = vld [vmem:[%s251 + $0x60] sm:$0xf]
      %v277 = vld [vmem:[%s251 + $0x64] sm:$0xf]
      %v278 = vld [vmem:[%s251 + $0x68] sm:$0x1]
      %v279 = vld [vmem:[%s251 + $0x6c] sm:$0xf]
      %v280 = vld [vmem:[%s251 + $0x70] sm:$0xf]
      %v281 = vld [vmem:[%s251 + $0x74] sm:$0x1]
      %v282 = vld [vmem:[%s251 + $0x78] sm:$0xf]
      %v283 = vld [vmem:[%s251 + $0x7c] sm:$0xf]
      %v284 = vld [vmem:[%s251 + $0x80] sm:$0x1]
      %v285 = vld [vmem:[%s251 + $0x84] sm:$0xf]
      %v286 = vld [vmem:[%s251 + $0x88] sm:$0xf]
      %v287 = vld [vmem:[%s251 + $0x8c] sm:$0x1]
      %v288 = vld [vmem:[%s251 + $0x90] sm:$0xf]
      %v289 = vld [vmem:[%s251 + $0x94] sm:$0xf]
      %v290 = vld [vmem:[%s251 + $0x98] sm:$0x1]
      %v291 = vld [vmem:[%s251 + $0x9c] sm:$0xf]
      %v292 = vld [vmem:[%s251 + $0xa0] sm:$0xf]
      %v293 = vld [vmem:[%s251 + $0xa4] sm:$0x1]
      %v294 = vld [vmem:[%s251 + $0xa8] sm:$0xf]
      %v295 = vld [vmem:[%s251 + $0xac] sm:$0xf]
      %v296 = vld [vmem:[%s251 + $0xb0] sm:$0x1]
      %v297 = vld [vmem:[%s251 + $0xb4] sm:$0xf]
      %v298 = vld [vmem:[%s251 + $0xb8] sm:$0xf]
      %v299 = vld [vmem:[%s251 + $0xbc] sm:$0x1]
      %v300 = vld [vmem:[%s251 + $0xc0] sm:$0xf]
      %v301 = vld [vmem:[%s251 + $0xc4] sm:$0xf]
      %v302 = vld [vmem:[%s251 + $0xc8] sm:$0x1]
      %v303 = vld [vmem:[%s251 + $0xcc] sm:$0xf]
      %v304 = vld [vmem:[%s251 + $0xd0] sm:$0xf]
      %v305 = vld [vmem:[%s251 + $0xd4] sm:$0x1]
      %v338 = vunpack.c.l.b16 %v252
      %v339 = vunpack.c.l.b16 %v253
      %v340 = vunpack.c.l.b16 %v255
      %v341 = vunpack.c.l.b16 %v256
      %v342 = vunpack.c.l.b16 %v258
      %v343 = vunpack.c.l.b16 %v259
      %v344 = vunpack.c.l.b16 %v261
      %v345 = vunpack.c.l.b16 %v262
      %v346 = vunpack.c.l.b16 %v264
      %v347 = vunpack.c.l.b16 %v265
      %v348 = vunpack.c.l.b16 %v267
      %v349 = vunpack.c.l.b16 %v268
      %v350 = vunpack.c.l.b16 %v270
      %v351 = vunpack.c.l.b16 %v271
      %v352 = vunpack.c.l.b16 %v273
      %v353 = vunpack.c.l.b16 %v274
      %v354 = vunpack.c.l.b16 %v276
      %v355 = vunpack.c.l.b16 %v277
      %v356 = vunpack.c.l.b16 %v279
      %v357 = vunpack.c.l.b16 %v280
      %v358 = vunpack.c.l.b16 %v282
      %v359 = vunpack.c.l.b16 %v283
      %v360 = vunpack.c.l.b16 %v285
      %v361 = vunpack.c.l.b16 %v286
      %v362 = vunpack.c.l.b16 %v288
      %v363 = vunpack.c.l.b16 %v289
      %v364 = vunpack.c.l.b16 %v291
      %v365 = vunpack.c.l.b16 %v292
      %v366 = vunpack.c.l.b16 %v294
      %v367 = vunpack.c.l.b16 %v295
      %v368 = vunpack.c.l.b16 %v297
      %v369 = vunpack.c.l.b16 %v298
      %v370 = vpack.c.b16 %v339, %v338
      %v371 = vpack.c.b16 %v341, %v340
      %v372 = vpack.c.b16 %v343, %v342
      %v373 = vpack.c.b16 %v345, %v344
      %v374 = vpack.c.b16 %v347, %v346
      %v375 = vpack.c.b16 %v349, %v348
      %v376 = vpack.c.b16 %v351, %v350
      %v377 = vpack.c.b16 %v353, %v352
      %v378 = vpack.c.b16 %v355, %v354
      %v379 = vpack.c.b16 %v357, %v356
      %v380 = vpack.c.b16 %v359, %v358
      %v381 = vpack.c.b16 %v361, %v360
      %v382 = vpack.c.b16 %v363, %v362
      %v383 = vpack.c.b16 %v365, %v364
      %v384 = vpack.c.b16 %v367, %v366
      %v385 = vpack.c.b16 %v369, %v368
      %v402 = vunpack.c.l.b16 %v254
      %v403 = vunpack.c.l.b16 %v257
      %v404 = vunpack.c.l.b16 %v260
      %v405 = vunpack.c.l.b16 %v263
      %v406 = vunpack.c.l.b16 %v266
      %v407 = vunpack.c.l.b16 %v269
      %v408 = vunpack.c.l.b16 %v272
      %v409 = vunpack.c.l.b16 %v275
      %v410 = vunpack.c.l.b16 %v278
      %v411 = vunpack.c.l.b16 %v281
      %v412 = vunpack.c.l.b16 %v284
      %v413 = vunpack.c.l.b16 %v287
      %v414 = vunpack.c.l.b16 %v290
      %v415 = vunpack.c.l.b16 %v293
      %v416 = vunpack.c.l.b16 %v296
      %v417 = vunpack.c.l.b16 %v299
      %v418 = vpack.c.b16 %v402, %v402
      %v419 = vpack.c.b16 %v403, %v403
      %v420 = vpack.c.b16 %v404, %v404
      %v421 = vpack.c.b16 %v405, %v405
      %v422 = vpack.c.b16 %v406, %v406
      %v423 = vpack.c.b16 %v407, %v407
      %v424 = vpack.c.b16 %v408, %v408
      %v425 = vpack.c.b16 %v409, %v409
      %v426 = vpack.c.b16 %v410, %v410
      %v427 = vpack.c.b16 %v411, %v411
      %v428 = vpack.c.b16 %v412, %v412
      %v429 = vpack.c.b16 %v413, %v413
      %v430 = vpack.c.b16 %v414, %v414
      %v431 = vpack.c.b16 %v415, %v415
      %v432 = vpack.c.b16 %v416, %v416
      %v433 = vpack.c.b16 %v417, %v417
      %vm434 = vsmask.f32 7424
      %v436 = vshrl.u32 %v370, 16
      %v438 = vshll.u32 %v370, 16
      %v440 = vrot.slane %v438, 1
      %v441 = vor.u32 %v436, %v440
      %v443 = vshll.u32 %v418, 16
      %v445 = vrot.slane %v443, 1
      %v446 = vsel %vm434, %v441, %v445
      %v448 = vshrl.u32 %v371, 16
      %v450 = vshll.u32 %v371, 16
      %v452 = vrot.slane %v450, 1
      %v453 = vor.u32 %v448, %v452
      %v455 = vshll.u32 %v419, 16
      %v457 = vrot.slane %v455, 1
      %v458 = vsel %vm434, %v453, %v457
      %v460 = vshrl.u32 %v372, 16
      %v462 = vshll.u32 %v372, 16
      %v464 = vrot.slane %v462, 1
      %v465 = vor.u32 %v460, %v464
      %v467 = vshll.u32 %v420, 16
      %v469 = vrot.slane %v467, 1
      %v470 = vsel %vm434, %v465, %v469
      %v472 = vshrl.u32 %v373, 16
      %v474 = vshll.u32 %v373, 16
      %v476 = vrot.slane %v474, 1
      %v477 = vor.u32 %v472, %v476
      %v479 = vshll.u32 %v421, 16
      %v481 = vrot.slane %v479, 1
      %v482 = vsel %vm434, %v477, %v481
      %v484 = vshrl.u32 %v374, 16
      %v486 = vshll.u32 %v374, 16
      %v488 = vrot.slane %v486, 1
      %v489 = vor.u32 %v484, %v488
      %v491 = vshll.u32 %v422, 16
      %v493 = vrot.slane %v491, 1
      %v494 = vsel %vm434, %v489, %v493
      %v496 = vshrl.u32 %v375, 16
      %v498 = vshll.u32 %v375, 16
      %v500 = vrot.slane %v498, 1
      %v501 = vor.u32 %v496, %v500
      %v503 = vshll.u32 %v423, 16
      %v505 = vrot.slane %v503, 1
      %v506 = vsel %vm434, %v501, %v505
      %v508 = vshrl.u32 %v376, 16
      %v510 = vshll.u32 %v376, 16
      %v512 = vrot.slane %v510, 1
      %v513 = vor.u32 %v508, %v512
      %v515 = vshll.u32 %v424, 16
      %v517 = vrot.slane %v515, 1
      %v518 = vsel %vm434, %v513, %v517
      %v520 = vshrl.u32 %v377, 16
      %v522 = vshll.u32 %v377, 16
      %v524 = vrot.slane %v522, 1
      %v525 = vor.u32 %v520, %v524
      %v527 = vshll.u32 %v425, 16
      %v529 = vrot.slane %v527, 1
      %v530 = vsel %vm434, %v525, %v529
      %v532 = vshrl.u32 %v378, 16
      %v534 = vshll.u32 %v378, 16
      %v536 = vrot.slane %v534, 1
      %v537 = vor.u32 %v532, %v536
      %v539 = vshll.u32 %v426, 16
      %v541 = vrot.slane %v539, 1
      %v542 = vsel %vm434, %v537, %v541
      %v544 = vshrl.u32 %v379, 16
      %v546 = vshll.u32 %v379, 16
      %v548 = vrot.slane %v546, 1
      %v549 = vor.u32 %v544, %v548
      %v551 = vshll.u32 %v427, 16
      %v553 = vrot.slane %v551, 1
      %v554 = vsel %vm434, %v549, %v553
      %v556 = vshrl.u32 %v380, 16
      %v558 = vshll.u32 %v380, 16
      %v560 = vrot.slane %v558, 1
      %v561 = vor.u32 %v556, %v560
      %v563 = vshll.u32 %v428, 16
      %v565 = vrot.slane %v563, 1
      %v566 = vsel %vm434, %v561, %v565
      %v568 = vshrl.u32 %v381, 16
      %v570 = vshll.u32 %v381, 16
      %v572 = vrot.slane %v570, 1
      %v573 = vor.u32 %v568, %v572
      %v575 = vshll.u32 %v429, 16
      %v577 = vrot.slane %v575, 1
      %v578 = vsel %vm434, %v573, %v577
      %v580 = vshrl.u32 %v382, 16
      %v582 = vshll.u32 %v382, 16
      %v584 = vrot.slane %v582, 1
      %v585 = vor.u32 %v580, %v584
      %v587 = vshll.u32 %v430, 16
      %v589 = vrot.slane %v587, 1
      %v590 = vsel %vm434, %v585, %v589
      %v592 = vshrl.u32 %v383, 16
      %v594 = vshll.u32 %v383, 16
      %v596 = vrot.slane %v594, 1
      %v597 = vor.u32 %v592, %v596
      %v599 = vshll.u32 %v431, 16
      %v601 = vrot.slane %v599, 1
      %v602 = vsel %vm434, %v597, %v601
      %v604 = vshrl.u32 %v384, 16
      %v606 = vshll.u32 %v384, 16
      %v608 = vrot.slane %v606, 1
      %v609 = vor.u32 %v604, %v608
      %v611 = vshll.u32 %v432, 16
      %v613 = vrot.slane %v611, 1
      %v614 = vsel %vm434, %v609, %v613
      %v616 = vshrl.u32 %v385, 16
      %v618 = vshll.u32 %v385, 16
      %v620 = vrot.slane %v618, 1
      %v621 = vor.u32 %v616, %v620
      %v623 = vshll.u32 %v433, 16
      %v625 = vrot.slane %v623, 1
      %v626 = vsel %vm434, %v621, %v625
      %627 = vrot.lane.b32.xlu0 %v446, 4
      %v628 = vpop.permute.xlu0 %627
      %629 = vrot.lane.b32.xlu0 %v458, 4
      %v630 = vpop.permute.xlu0 %629
      %631 = vrot.lane.b32.xlu0 %v470, 4
      %v632 = vpop.permute.xlu0 %631
      %633 = vrot.lane.b32.xlu0 %v482, 4
      %v634 = vpop.permute.xlu0 %633
      %635 = vrot.lane.b32.xlu0 %v494, 4
      %v636 = vpop.permute.xlu0 %635
      %637 = vrot.lane.b32.xlu0 %v506, 4
      %v638 = vpop.permute.xlu0 %637
      %639 = vrot.lane.b32.xlu0 %v518, 4
      %v640 = vpop.permute.xlu0 %639
      %641 = vrot.lane.b32.xlu0 %v530, 4
      %v642 = vpop.permute.xlu0 %641
      %643 = vrot.lane.b32.xlu0 %v542, 4
      %v644 = vpop.permute.xlu0 %643
      %645 = vrot.lane.b32.xlu0 %v554, 4
      %v646 = vpop.permute.xlu0 %645
      %647 = vrot.lane.b32.xlu0 %v566, 4
      %v648 = vpop.permute.xlu0 %647
      %649 = vrot.lane.b32.xlu0 %v578, 4
      %v650 = vpop.permute.xlu0 %649
      %651 = vrot.lane.b32.xlu0 %v590, 4
      %v652 = vpop.permute.xlu0 %651
      %653 = vrot.lane.b32.xlu0 %v602, 4
      %v654 = vpop.permute.xlu0 %653
      %655 = vrot.lane.b32.xlu0 %v614, 4
      %v656 = vpop.permute.xlu0 %655
      %657 = vrot.lane.b32.xlu0 %v626, 4
      %v658 = vpop.permute.xlu0 %657
      %vm659 = vcmask 1046528
      %v660 = vrot.slane %v370, 1
      %v661 = vrot.slane %v418, 1
      %v662 = vsel %vm659, %v660, %v661
      %v663 = vrot.slane %v371, 1
      %v664 = vrot.slane %v419, 1
      %v665 = vsel %vm659, %v663, %v664
      %v666 = vrot.slane %v372, 1
      %v667 = vrot.slane %v420, 1
      %v668 = vsel %vm659, %v666, %v667
      %v669 = vrot.slane %v373, 1
      %v670 = vrot.slane %v421, 1
      %v671 = vsel %vm659, %v669, %v670
      %v672 = vrot.slane %v374, 1
      %v673 = vrot.slane %v422, 1
      %v674 = vsel %vm659, %v672, %v673
      %v675 = vrot.slane %v375, 1
      %v676 = vrot.slane %v423, 1
      %v677 = vsel %vm659, %v675, %v676
      %v678 = vrot.slane %v376, 1
      %v679 = vrot.slane %v424, 1
      %v680 = vsel %vm659, %v678, %v679
      %v681 = vrot.slane %v377, 1
      %v682 = vrot.slane %v425, 1
      %v683 = vsel %vm659, %v681, %v682
      %v684 = vrot.slane %v378, 1
      %v685 = vrot.slane %v426, 1
      %v686 = vsel %vm659, %v684, %v685
      %v687 = vrot.slane %v379, 1
      %v688 = vrot.slane %v427, 1
      %v689 = vsel %vm659, %v687, %v688
      %v690 = vrot.slane %v380, 1
      %v691 = vrot.slane %v428, 1
      %v692 = vsel %vm659, %v690, %v691
      %v693 = vrot.slane %v381, 1
      %v694 = vrot.slane %v429, 1
      %v695 = vsel %vm659, %v693, %v694
      %v696 = vrot.slane %v382, 1
      %v697 = vrot.slane %v430, 1
      %v698 = vsel %vm659, %v696, %v697
      %v699 = vrot.slane %v383, 1
      %v700 = vrot.slane %v431, 1
      %v701 = vsel %vm659, %v699, %v700
      %v702 = vrot.slane %v384, 1
      %v703 = vrot.slane %v432, 1
      %v704 = vsel %vm659, %v702, %v703
      %v705 = vrot.slane %v385, 1
      %v706 = vrot.slane %v433, 1
      %v707 = vsel %vm659, %v705, %v706
      %708 = vrot.lane.b32.xlu0 %v662, 8
      %v709 = vpop.permute.xlu0 %708
      %710 = vrot.lane.b32.xlu0 %v665, 8
      %v711 = vpop.permute.xlu0 %710
      %712 = vrot.lane.b32.xlu0 %v668, 8
      %v713 = vpop.permute.xlu0 %712
      %714 = vrot.lane.b32.xlu0 %v671, 8
      %v715 = vpop.permute.xlu0 %714
      %716 = vrot.lane.b32.xlu0 %v674, 8
      %v717 = vpop.permute.xlu0 %716
      %718 = vrot.lane.b32.xlu0 %v677, 8
      %v719 = vpop.permute.xlu0 %718
      %720 = vrot.lane.b32.xlu0 %v680, 8
      %v721 = vpop.permute.xlu0 %720
      %722 = vrot.lane.b32.xlu0 %v683, 8
      %v723 = vpop.permute.xlu0 %722
      %724 = vrot.lane.b32.xlu0 %v686, 8
      %v725 = vpop.permute.xlu0 %724
      %726 = vrot.lane.b32.xlu0 %v689, 8
      %v727 = vpop.permute.xlu0 %726
      %728 = vrot.lane.b32.xlu0 %v692, 8
      %v729 = vpop.permute.xlu0 %728
      %730 = vrot.lane.b32.xlu0 %v695, 8
      %v731 = vpop.permute.xlu0 %730
      %732 = vrot.lane.b32.xlu0 %v698, 8
      %v733 = vpop.permute.xlu0 %732
      %734 = vrot.lane.b32.xlu0 %v701, 8
      %v735 = vpop.permute.xlu0 %734
      %736 = vrot.lane.b32.xlu0 %v704, 8
      %v737 = vpop.permute.xlu0 %736
      %738 = vrot.lane.b32.xlu0 %v707, 8
      %v739 = vpop.permute.xlu0 %738
      %v742 = vunpack.c.l.b16 %v300
      %v743 = vunpack.c.l.b16 %v301
      %v744 = vpack.c.b16 %v743, %v742
      %745 = vrot.lane.b32.xlu0 %v371, 12
      %v746 = vpop.permute.xlu0 %745
      %747 = vrot.lane.b32.xlu0 %v372, 12
      %v748 = vpop.permute.xlu0 %747
      %749 = vrot.lane.b32.xlu0 %v373, 12
      %v750 = vpop.permute.xlu0 %749
      %751 = vrot.lane.b32.xlu0 %v374, 12
      %v752 = vpop.permute.xlu0 %751
      %753 = vrot.lane.b32.xlu0 %v375, 12
      %v754 = vpop.permute.xlu0 %753
      %755 = vrot.lane.b32.xlu0 %v376, 12
      %v756 = vpop.permute.xlu0 %755
      %757 = vrot.lane.b32.xlu0 %v377, 12
      %v758 = vpop.permute.xlu0 %757
      %759 = vrot.lane.b32.xlu0 %v378, 12
      %v760 = vpop.permute.xlu0 %759
      %761 = vrot.lane.b32.xlu0 %v379, 12
      %v762 = vpop.permute.xlu0 %761
      %763 = vrot.lane.b32.xlu0 %v380, 12
      %v764 = vpop.permute.xlu0 %763
      %765 = vrot.lane.b32.xlu0 %v381, 12
      %v766 = vpop.permute.xlu0 %765
      %767 = vrot.lane.b32.xlu0 %v382, 12
      %v768 = vpop.permute.xlu0 %767
      %769 = vrot.lane.b32.xlu0 %v383, 12
      %v770 = vpop.permute.xlu0 %769
      %771 = vrot.lane.b32.xlu0 %v384, 12
      %v772 = vpop.permute.xlu0 %771
      %773 = vrot.lane.b32.xlu0 %v385, 12
      %v774 = vpop.permute.xlu0 %773
      %775 = vrot.lane.b32.xlu0 %v744, 12
      %v776 = vpop.permute.xlu0 %775
      %v778 = vunpack.c.l.b16 %v302
      %v779 = vpack.c.b16 %v778, %v778
      %v781 = vshrl.u32 %v744, 16
      %v783 = vshll.u32 %v744, 16
      %v785 = vrot.slane %v783, 1
      %v786 = vor.u32 %v781, %v785
      %v788 = vshll.u32 %v779, 16
      %v790 = vrot.slane %v788, 1
      %v791 = vsel %vm434, %v786, %v790
      %792 = vrot.lane.b32.xlu0 %v458, 16
      %v793 = vpop.permute.xlu0 %792
      %794 = vrot.lane.b32.xlu0 %v470, 16
      %v795 = vpop.permute.xlu0 %794
      %796 = vrot.lane.b32.xlu0 %v482, 16
      %v797 = vpop.permute.xlu0 %796
      %798 = vrot.lane.b32.xlu0 %v494, 16
      %v799 = vpop.permute.xlu0 %798
      %800 = vrot.lane.b32.xlu0 %v506, 16
      %v801 = vpop.permute.xlu0 %800
      %802 = vrot.lane.b32.xlu0 %v518, 16
      %v803 = vpop.permute.xlu0 %802
      %804 = vrot.lane.b32.xlu0 %v530, 16
      %v805 = vpop.permute.xlu0 %804
      %806 = vrot.lane.b32.xlu0 %v542, 16
      %v807 = vpop.permute.xlu0 %806
      %808 = vrot.lane.b32.xlu0 %v554, 16
      %v809 = vpop.permute.xlu0 %808
      %810 = vrot.lane.b32.xlu0 %v566, 16
      %v811 = vpop.permute.xlu0 %810
      %812 = vrot.lane.b32.xlu0 %v578, 16
      %v813 = vpop.permute.xlu0 %812
      %814 = vrot.lane.b32.xlu0 %v590, 16
      %v815 = vpop.permute.xlu0 %814
      %816 = vrot.lane.b32.xlu0 %v602, 16
      %v817 = vpop.permute.xlu0 %816
      %818 = vrot.lane.b32.xlu0 %v614, 16
      %v819 = vpop.permute.xlu0 %818
      %820 = vrot.lane.b32.xlu0 %v626, 16
      %v821 = vpop.permute.xlu0 %820
      %822 = vrot.lane.b32.xlu0 %v791, 16
      %v823 = vpop.permute.xlu0 %822
      %v824 = vrot.slane %v744, 1
      %v825 = vrot.slane %v779, 1
      %v826 = vsel %vm659, %v824, %v825
      %827 = vrot.lane.b32.xlu0 %v665, 20
      %v828 = vpop.permute.xlu0 %827
      %829 = vrot.lane.b32.xlu0 %v668, 20
      %v830 = vpop.permute.xlu0 %829
      %831 = vrot.lane.b32.xlu0 %v671, 20
      %v832 = vpop.permute.xlu0 %831
      %833 = vrot.lane.b32.xlu0 %v674, 20
      %v834 = vpop.permute.xlu0 %833
      %835 = vrot.lane.b32.xlu0 %v677, 20
      %v836 = vpop.permute.xlu0 %835
      %837 = vrot.lane.b32.xlu0 %v680, 20
      %v838 = vpop.permute.xlu0 %837
      %839 = vrot.lane.b32.xlu0 %v683, 20
      %v840 = vpop.permute.xlu0 %839
      %841 = vrot.lane.b32.xlu0 %v686, 20
      %v842 = vpop.permute.xlu0 %841
      %843 = vrot.lane.b32.xlu0 %v689, 20
      %v844 = vpop.permute.xlu0 %843
      %845 = vrot.lane.b32.xlu0 %v692, 20
      %v846 = vpop.permute.xlu0 %845
      %847 = vrot.lane.b32.xlu0 %v695, 20
      %v848 = vpop.permute.xlu0 %847
      %849 = vrot.lane.b32.xlu0 %v698, 20
      %v850 = vpop.permute.xlu0 %849
      %851 = vrot.lane.b32.xlu0 %v701, 20
      %v852 = vpop.permute.xlu0 %851
      %853 = vrot.lane.b32.xlu0 %v704, 20
      %v854 = vpop.permute.xlu0 %853
      %855 = vrot.lane.b32.xlu0 %v707, 20
      %v856 = vpop.permute.xlu0 %855
      %857 = vrot.lane.b32.xlu0 %v826, 20
      %v858 = vpop.permute.xlu0 %857
      %v861 = vunpack.c.l.b16 %v303
      %v862 = vunpack.c.l.b16 %v304
      %v863 = vpack.c.b16 %v862, %v861
      %864 = vrot.lane.b32.xlu0 %v372, 24
      %v865 = vpop.permute.xlu0 %864
      %866 = vrot.lane.b32.xlu0 %v373, 24
      %v867 = vpop.permute.xlu0 %866
      %868 = vrot.lane.b32.xlu0 %v374, 24
      %v869 = vpop.permute.xlu0 %868
      %870 = vrot.lane.b32.xlu0 %v375, 24
      %v871 = vpop.permute.xlu0 %870
      %872 = vrot.lane.b32.xlu0 %v376, 24
      %v873 = vpop.permute.xlu0 %872
      %874 = vrot.lane.b32.xlu0 %v377, 24
      %v875 = vpop.permute.xlu0 %874
      %876 = vrot.lane.b32.xlu0 %v378, 24
      %v877 = vpop.permute.xlu0 %876
      %878 = vrot.lane.b32.xlu0 %v379, 24
      %v879 = vpop.permute.xlu0 %878
      %880 = vrot.lane.b32.xlu0 %v380, 24
      %v881 = vpop.permute.xlu0 %880
      %882 = vrot.lane.b32.xlu0 %v381, 24
      %v883 = vpop.permute.xlu0 %882
      %884 = vrot.lane.b32.xlu0 %v382, 24
      %v885 = vpop.permute.xlu0 %884
      %886 = vrot.lane.b32.xlu0 %v383, 24
      %v887 = vpop.permute.xlu0 %886
      %888 = vrot.lane.b32.xlu0 %v384, 24
      %v889 = vpop.permute.xlu0 %888
      %890 = vrot.lane.b32.xlu0 %v385, 24
      %v891 = vpop.permute.xlu0 %890
      %892 = vrot.lane.b32.xlu0 %v744, 24
      %v893 = vpop.permute.xlu0 %892
      %894 = vrot.lane.b32.xlu0 %v863, 24
      %v895 = vpop.permute.xlu0 %894
      %v897 = vunpack.c.l.b16 %v305
      %v898 = vpack.c.b16 %v897, %v897
      %v900 = vshrl.u32 %v863, 16
      %v902 = vshll.u32 %v863, 16
      %v904 = vrot.slane %v902, 1
      %v905 = vor.u32 %v900, %v904
      %v907 = vshll.u32 %v898, 16
      %v909 = vrot.slane %v907, 1
      %v910 = vsel %vm434, %v905, %v909
      %911 = vrot.lane.b32.xlu0 %v470, 28
      %v912 = vpop.permute.xlu0 %911
      %913 = vrot.lane.b32.xlu0 %v482, 28
      %v914 = vpop.permute.xlu0 %913
      %915 = vrot.lane.b32.xlu0 %v494, 28
      %v916 = vpop.permute.xlu0 %915
      %917 = vrot.lane.b32.xlu0 %v506, 28
      %v918 = vpop.permute.xlu0 %917
      %919 = vrot.lane.b32.xlu0 %v518, 28
      %v920 = vpop.permute.xlu0 %919
      %921 = vrot.lane.b32.xlu0 %v530, 28
      %v922 = vpop.permute.xlu0 %921
      %923 = vrot.lane.b32.xlu0 %v542, 28
      %v924 = vpop.permute.xlu0 %923
      %925 = vrot.lane.b32.xlu0 %v554, 28
      %v926 = vpop.permute.xlu0 %925
      %927 = vrot.lane.b32.xlu0 %v566, 28
      %v928 = vpop.permute.xlu0 %927
      %929 = vrot.lane.b32.xlu0 %v578, 28
      %v930 = vpop.permute.xlu0 %929
      %931 = vrot.lane.b32.xlu0 %v590, 28
      %v932 = vpop.permute.xlu0 %931
      %933 = vrot.lane.b32.xlu0 %v602, 28
      %v934 = vpop.permute.xlu0 %933
      %935 = vrot.lane.b32.xlu0 %v614, 28
      %v936 = vpop.permute.xlu0 %935
      %937 = vrot.lane.b32.xlu0 %v626, 28
      %v938 = vpop.permute.xlu0 %937
      %939 = vrot.lane.b32.xlu0 %v791, 28
      %v940 = vpop.permute.xlu0 %939
      %941 = vrot.lane.b32.xlu0 %v910, 28
      %v942 = vpop.permute.xlu0 %941
      %v943 = vrot.slane %v863, 1
      %v944 = vrot.slane %v898, 1
      %v945 = vsel %vm659, %v943, %v944
      %946 = vrot.lane.b32.xlu0 %v668, 32
      %v947 = vpop.permute.xlu0 %946
      %948 = vrot.lane.b32.xlu0 %v671, 32
      %v949 = vpop.permute.xlu0 %948
      %950 = vrot.lane.b32.xlu0 %v674, 32
      %v951 = vpop.permute.xlu0 %950
      %952 = vrot.lane.b32.xlu0 %v677, 32
      %v953 = vpop.permute.xlu0 %952
      %954 = vrot.lane.b32.xlu0 %v680, 32
      %v955 = vpop.permute.xlu0 %954
      %956 = vrot.lane.b32.xlu0 %v683, 32
      %v957 = vpop.permute.xlu0 %956
      %958 = vrot.lane.b32.xlu0 %v686, 32
      %v959 = vpop.permute.xlu0 %958
      %960 = vrot.lane.b32.xlu0 %v689, 32
      %v961 = vpop.permute.xlu0 %960
      %962 = vrot.lane.b32.xlu0 %v692, 32
      %v963 = vpop.permute.xlu0 %962
      %964 = vrot.lane.b32.xlu0 %v695, 32
      %v965 = vpop.permute.xlu0 %964
      %966 = vrot.lane.b32.xlu0 %v698, 32
      %v967 = vpop.permute.xlu0 %966
      %968 = vrot.lane.b32.xlu0 %v701, 32
      %v969 = vpop.permute.xlu0 %968
      %970 = vrot.lane.b32.xlu0 %v704, 32
      %v971 = vpop.permute.xlu0 %970
      %972 = vrot.lane.b32.xlu0 %v707, 32
      %v973 = vpop.permute.xlu0 %972
      %974 = vrot.lane.b32.xlu0 %v826, 32
      %v975 = vpop.permute.xlu0 %974
      %976 = vrot.lane.b32.xlu0 %v945, 32
      %v977 = vpop.permute.xlu0 %976
      %vm978 = vcmask 31744
      %v980 = vsel %vm978, %v370, %v628
      %v982 = vsel %vm978, %v371, %v630
      %v984 = vsel %vm978, %v372, %v632
      %v986 = vsel %vm978, %v373, %v634
      %v988 = vsel %vm978, %v374, %v636
      %v990 = vsel %vm978, %v375, %v638
      %v992 = vsel %vm978, %v376, %v640
      %v994 = vsel %vm978, %v377, %v642
      %v996 = vsel %vm978, %v378, %v644
      %v998 = vsel %vm978, %v379, %v646
      %v1000 = vsel %vm978, %v380, %v648
      %v1002 = vsel %vm978, %v381, %v650
      %v1004 = vsel %vm978, %v382, %v652
      %v1006 = vsel %vm978, %v383, %v654
      %v1008 = vsel %vm978, %v384, %v656
      %v1010 = vsel %vm978, %v385, %v658
      %vm1011 = vcmask 64512
      %v1013 = vsel %vm1011, %v980, %v709
      %v1015 = vsel %vm1011, %v982, %v711
      %v1017 = vsel %vm1011, %v984, %v713
      %v1019 = vsel %vm1011, %v986, %v715
      %v1021 = vsel %vm1011, %v988, %v717
      %v1023 = vsel %vm1011, %v990, %v719
      %v1025 = vsel %vm1011, %v992, %v721
      %v1027 = vsel %vm1011, %v994, %v723
      %v1029 = vsel %vm1011, %v996, %v725
      %v1031 = vsel %vm1011, %v998, %v727
      %v1033 = vsel %vm1011, %v1000, %v729
      %v1035 = vsel %vm1011, %v1002, %v731
      %v1037 = vsel %vm1011, %v1004, %v733
      %v1039 = vsel %vm1011, %v1006, %v735
      %v1041 = vsel %vm1011, %v1008, %v737
      %v1043 = vsel %vm1011, %v1010, %v739
      %vm1044 = vcmask 97280
      %v1046 = vsel %vm1044, %v1013, %v746
      %v1048 = vsel %vm1044, %v1015, %v748
      %v1050 = vsel %vm1044, %v1017, %v750
      %v1052 = vsel %vm1044, %v1019, %v752
      %v1054 = vsel %vm1044, %v1021, %v754
      %v1056 = vsel %vm1044, %v1023, %v756
      %v1058 = vsel %vm1044, %v1025, %v758
      %v1060 = vsel %vm1044, %v1027, %v760
      %v1062 = vsel %vm1044, %v1029, %v762
      %v1064 = vsel %vm1044, %v1031, %v764
      %v1066 = vsel %vm1044, %v1033, %v766
      %v1068 = vsel %vm1044, %v1035, %v768
      %v1070 = vsel %vm1044, %v1037, %v770
      %v1072 = vsel %vm1044, %v1039, %v772
      %v1074 = vsel %vm1044, %v1041, %v774
      %v1076 = vsel %vm1044, %v1043, %v776
      %vm1077 = vcmask 130048
      %v1079 = vsel %vm1077, %v1046, %v793
      %v1081 = vsel %vm1077, %v1048, %v795
      %v1083 = vsel %vm1077, %v1050, %v797
      %v1085 = vsel %vm1077, %v1052, %v799
      %v1087 = vsel %vm1077, %v1054, %v801
      %v1089 = vsel %vm1077, %v1056, %v803
      %v1091 = vsel %vm1077, %v1058, %v805
      %v1093 = vsel %vm1077, %v1060, %v807
      %v1095 = vsel %vm1077, %v1062, %v809
      %v1097 = vsel %vm1077, %v1064, %v811
      %v1099 = vsel %vm1077, %v1066, %v813
      %v1101 = vsel %vm1077, %v1068, %v815
      %v1103 = vsel %vm1077, %v1070, %v817
      %v1105 = vsel %vm1077, %v1072, %v819
      %v1107 = vsel %vm1077, %v1074, %v821
      %v1109 = vsel %vm1077, %v1076, %v823
      %vm1110 = vcmask 162816
      %v1112 = vsel %vm1110, %v1079, %v828
      %v1114 = vsel %vm1110, %v1081, %v830
      %v1116 = vsel %vm1110, %v1083, %v832
      %v1118 = vsel %vm1110, %v1085, %v834
      %v1120 = vsel %vm1110, %v1087, %v836
      %v1122 = vsel %vm1110, %v1089, %v838
      %v1124 = vsel %vm1110, %v1091, %v840
      %v1126 = vsel %vm1110, %v1093, %v842
      %v1128 = vsel %vm1110, %v1095, %v844
      %v1130 = vsel %vm1110, %v1097, %v846
      %v1132 = vsel %vm1110, %v1099, %v848
      %v1134 = vsel %vm1110, %v1101, %v850
      %v1136 = vsel %vm1110, %v1103, %v852
      %v1138 = vsel %vm1110, %v1105, %v854
      %v1140 = vsel %vm1110, %v1107, %v856
      %v1142 = vsel %vm1110, %v1109, %v858
      %vm1143 = vcmask 195584
      %v1145 = vsel %vm1143, %v1112, %v865
      %v1147 = vsel %vm1143, %v1114, %v867
      %v1149 = vsel %vm1143, %v1116, %v869
      %v1151 = vsel %vm1143, %v1118, %v871
      %v1153 = vsel %vm1143, %v1120, %v873
      %v1155 = vsel %vm1143, %v1122, %v875
      %v1157 = vsel %vm1143, %v1124, %v877
      %v1159 = vsel %vm1143, %v1126, %v879
      %v1161 = vsel %vm1143, %v1128, %v881
      %v1163 = vsel %vm1143, %v1130, %v883
      %v1165 = vsel %vm1143, %v1132, %v885
      %v1167 = vsel %vm1143, %v1134, %v887
      %v1169 = vsel %vm1143, %v1136, %v889
      %v1171 = vsel %vm1143, %v1138, %v891
      %v1173 = vsel %vm1143, %v1140, %v893
      %v1175 = vsel %vm1143, %v1142, %v895
      %vm1176 = vcmask 228352
      %v1178 = vsel %vm1176, %v1145, %v912
      %v1180 = vsel %vm1176, %v1147, %v914
      %v1182 = vsel %vm1176, %v1149, %v916
      %v1184 = vsel %vm1176, %v1151, %v918
      %v1186 = vsel %vm1176, %v1153, %v920
      %v1188 = vsel %vm1176, %v1155, %v922
      %v1190 = vsel %vm1176, %v1157, %v924
      %v1192 = vsel %vm1176, %v1159, %v926
      %v1194 = vsel %vm1176, %v1161, %v928
      %v1196 = vsel %vm1176, %v1163, %v930
      %v1198 = vsel %vm1176, %v1165, %v932
      %v1200 = vsel %vm1176, %v1167, %v934
      %v1202 = vsel %vm1176, %v1169, %v936
      %v1204 = vsel %vm1176, %v1171, %v938
      %v1206 = vsel %vm1176, %v1173, %v940
      %v1208 = vsel %vm1176, %v1175, %v942
      %vm1209 = vcmask 261120
      %v1211 = vsel %vm1209, %v1178, %v947
      %v1213 = vsel %vm1209, %v1180, %v949
      %v1215 = vsel %vm1209, %v1182, %v951
      %v1217 = vsel %vm1209, %v1184, %v953
      %v1219 = vsel %vm1209, %v1186, %v955
      %v1221 = vsel %vm1209, %v1188, %v957
      %v1223 = vsel %vm1209, %v1190, %v959
      %v1225 = vsel %vm1209, %v1192, %v961
      %v1227 = vsel %vm1209, %v1194, %v963
      %v1229 = vsel %vm1209, %v1196, %v965
      %v1231 = vsel %vm1209, %v1198, %v967
      %v1233 = vsel %vm1209, %v1200, %v969
      %v1235 = vsel %vm1209, %v1202, %v971
      %v1237 = vsel %vm1209, %v1204, %v973
      %v1239 = vsel %vm1209, %v1206, %v975
      %v1241 = vsel %vm1209, %v1208, %v977
      %v1242 = vld [vmem:[%s1] sm:$0xf]
      %v1243 = vld [vmem:[%s2] sm:$0xff]
      %1245 = vset.pattern.permute.xlu0 0
      %1246 = vperm.xlu0 %1245, %v1243
      %v1247 = vpop.permute.xlu0 %1246
      %vm1249 = vcmask 293888
      %v1251 = vsel %vm1249, %v1242, 0
      %v1253 = vsel %vm1249, %v1211, 0
      %v1255 = vsel %vm1249, %v1213, 0
      %v1257 = vsel %vm1249, %v1215, 0
      %v1259 = vsel %vm1249, %v1217, 0
      %v1261 = vsel %vm1249, %v1219, 0
      %v1263 = vsel %vm1249, %v1221, 0
      %v1265 = vsel %vm1249, %v1223, 0
      %v1267 = vsel %vm1249, %v1225, 0
      %v1269 = vsel %vm1249, %v1227, 0
      %v1271 = vsel %vm1249, %v1229, 0
      %v1273 = vsel %vm1249, %v1231, 0
      %v1275 = vsel %vm1249, %v1233, 0
      %v1277 = vsel %vm1249, %v1235, 0
      %v1279 = vsel %vm1249, %v1237, 0
      %v1281 = vsel %vm1249, %v1239, 0
      %v1283 = vsel %vm1249, %v1241, 0
      %1285 = vmatpush.bf16.xpose.msra.mxu0 %v1267
      %1286 = vmatpush.bf16.xpose.msra.mxu0 %v1265
      %1287 = vmatpush.bf16.xpose.msra.mxu0 %v1263
      %1288 = vmatpush.bf16.xpose.msra.mxu0 %v1261
      %1289 = vmatpush.bf16.xpose.msra.mxu0 %v1259
      %1290 = vmatpush.bf16.xpose.msra.mxu0 %v1257
      %1291 = vmatpush.bf16.xpose.msra.mxu0 %v1255
      %1292 = vmatpush.bf16.xpose.msra.mxu0 %v1253
      %1293 = vmatmul.bf16.gmra.mxu0 %v1251
      %v1294 = vpop.f32.mrf.mxu0
      %v1295 = vadd.f32 %v1247, %v1294
      %v1296 = vpop.f32.mrf.mxu0
      %1297 = vdwg.mxu0
      %1298 = vmatpush.bf16.xpose.msra.mxu0 %v1283
      %1299 = vmatpush.bf16.xpose.msra.mxu0 %v1281
      %1300 = vmatpush.bf16.xpose.msra.mxu0 %v1279
      %1301 = vmatpush.bf16.xpose.msra.mxu0 %v1277
      %1302 = vmatpush.bf16.xpose.msra.mxu0 %v1275
      %1303 = vmatpush.bf16.xpose.msra.mxu0 %v1273
      %1304 = vmatpush.bf16.xpose.msra.mxu0 %v1271
      %1305 = vmatpush.bf16.xpose.msra.mxu0 %v1269
      %1306 = vmatmul.bf16.gmra.mxu0 %v1251
      %v1307 = vpop.f32.mrf.mxu0
      %v1308 = vadd.f32 %v1247, %v1307
      %v1309 = vpop.f32.mrf.mxu0
      %1310 = vdwg.mxu0
      %s1311 = sld [smem:[#allocation2]]
      %vm1312 = vcmp.gt.f32.partialorder %v1295, 0.0
      %vm1313 = vcmp.gt.f32.partialorder %v1308, 0.0
      %v1314 = vstv %s1311
      %v1315 = vmul.f32 %v1314, %v1295
      %v1316 = vmul.f32 %v1314, %v1308
      %v1317 = vsel %vm1312, %v1295, %v1315
      %v1318 = vsel %vm1313, %v1308, %v1316
      %v1319 = vld [vmem:[%s4] sm:$0xff]
      %v1321 = vsel %vm1011, %v1319, 0
      %1323 = vmatpush.msra.mxu0 0.0
      %1324 = vmatpush.msra.mxu0 0.0
      %1325 = vmatpush.msra.mxu0 0.0
      %1326 = vmatpush.msra.mxu0 0.0
      %1327 = vmatpush.msra.mxu0 0.0
      %1328 = vmatpush.msra.mxu0 0.0
      %1329 = vmatpush.msra.mxu0 0.0
      %1330 = vmatpush.msra.mxu0 0.0
      %1331 = vmatpush.msra.mxu0 0.0
      %1332 = vmatpush.msra.mxu0 0.0
      %1333 = vmatpush.msra.mxu0 0.0
      %1334 = vmatpush.msra.mxu0 0.0
      %1335 = vmatpush.msra.mxu0 0.0
      %1336 = vmatpush.msra.mxu0 0.0
      %1337 = vmatpush.msra.mxu0 0.0
      %1338 = vmatpush.msra.mxu0 %v1317
      %1339 = vmatmul.f32.gmra.mxu0 %v1321
      %v1340 = vpop.f32.mrf.mxu0
      %v1341 = vadd.f32 0.0, %v1340
      %1342 = vdwg.mxu0
      %1343 = vmatpush.msra.mxu0 0.0
      %1344 = vmatpush.msra.mxu0 0.0
      %1345 = vmatpush.msra.mxu0 0.0
      %1346 = vmatpush.msra.mxu0 0.0
      %1347 = vmatpush.msra.mxu0 0.0
      %1348 = vmatpush.msra.mxu0 0.0
      %1349 = vmatpush.msra.mxu0 0.0
      %1350 = vmatpush.msra.mxu0 0.0
      %1351 = vmatpush.msra.mxu0 0.0
      %1352 = vmatpush.msra.mxu0 0.0
      %1353 = vmatpush.msra.mxu0 0.0
      %1354 = vmatpush.msra.mxu0 0.0
      %1355 = vmatpush.msra.mxu0 0.0
      %1356 = vmatpush.msra.mxu0 0.0
      %1357 = vmatpush.msra.mxu0 0.0
      %1358 = vmatpush.msra.mxu0 %v1318
      %1359 = vmatmul.f32.gmra.mxu0 %v1321
      %v1360 = vpop.f32.mrf.mxu0
      %v1361 = vadd.f32 0.0, %v1360
      %1362 = vdwg.mxu0
      %1363 = vst [vmem:[%s247] sm:$0xff] %v1341
      %1364 = vst [vmem:[%s247 + $0x8] sm:$0xff] %v1361
      %p1365 = scmp.lt.s32.totalorder %s21, 1
      %s1366 = scalar_select %p1365, %s21, 1
      %p1367 = scmp.lt.s32.totalorder %s22, 0
      %s1368 = scalar_select %p1367, %s22, 0
      %s1369 = smul.addr %s1368, 2
      %s1370 = smul.addr %s1366, 2
      %s1371 = sadd.s32 %s1369, %s1370
      %s1372 = smul.addr %s1371, 8
      %s1373 = scalar_lea.vmem %s5, %s1372
      // Predicated region
      $region41: #{conv_block_forward.1} parent=39 // pred_check
        %p1374 = pneg %p159
      $region42: #{conv_block_forward.1} parent=39 // pred_check_branch
        %1376 = sbr.rel (%p1374) target = $region44
      $region43: #{conv_block_forward.1} parent=39 // pred_region
        _
      $region44: #{conv_block_forward.1} parent=39 // pred_fallthru
        _
    $region40: #{conv_block_forward.1} parent=5 // pred_fallthru
      _
    %p1377 = scmp.le.s32.totalorder 2, %s12
    // Predicated region
    $region45: #{conv_block_forward.1} parent=5 // pred_check
      %p1378 = pneg %p1377
    $region46: #{conv_block_forward.1} parent=5 // pred_check_branch
      %1380 = sbr.rel (%p1378) target = $region48
    $region47: #{conv_block_forward.1} parent=5 // pred_region
      %s1381 = ssub.s32 %s12, 2
      // Predicated region
      $region49: #{conv_block_forward.1} parent=47 // pred_check
        %p1382 = pneg %p165
      $region50: #{conv_block_forward.1} parent=47 // pred_check_branch
        %1384 = sbr.rel (%p1382) target = $region52
      $region51: #{conv_block_forward.1} parent=47 // pred_region
        %p1385 = scmp.lt.s32.totalorder %s23, 1
        %s1386 = scalar_select %p1385, %s23, 1
        %p1387 = scmp.lt.s32.totalorder %s24, 0
        %s1388 = scalar_select %p1387, %s24, 0
        %s1389 = smul.addr %s1388, 2
        %s1390 = smul.addr %s1386, 2
        %s1391 = sadd.s32 %s1389, %s1390
        %s1392 = smul.addr %s1391, 8
        %s1393 = scalar_lea.vmem %s5, %s1392
      $region52: #{conv_block_forward.1} parent=47 // pred_fallthru
        _
    $region48: #{conv_block_forward.1} parent=5 // pred_fallthru
      _
  $region6: #{conv_block_forward.1} parent=0 // loop_footer
    %s16 = sadd.s32 1, %s12
  $region7: #{conv_block_forward.1} parent=0 // loop_footer_branch
    %11 = sbr.rel target = $region3
  $region8: #{conv_block_forward.1} parent=0 // loop_exit
    _

</llo_original>
